<compile_context>
chip_gen: v7x
topology: tpu7x:2x2x1
jax: 0.10.0
libtpu: 0.0.40
codegen_flags: <defaults>
</compile_context>

<pallas_src>
import functools
import math

import jax
import jax.numpy as jnp
from jax import lax
from jax.experimental import pallas as pl
from jax.experimental.pallas import tpu as pltpu


def _round_up(x, m):
    return ((x + m - 1) // m) * m


def _cosine_linear_kernel(x_ref, w_ref, wscale_ref, o_ref, *scratch,
                          xss_persists):
    # scratch is (xss_ref,) when the output dtype is f32 (accumulate directly
    # into the resident output tile), else (acc_ref, xss_ref).
    if len(scratch) == 2:
        acc_ref, xss_ref = scratch
    else:
        (xss_ref,) = scratch
        acc_ref = o_ref

    j = pl.program_id(1)
    k = pl.program_id(2)

    @pl.when(k == 0)
    def _():
        acc_ref[...] = jnp.zeros_like(acc_ref)

    if xss_persists:
        # ||x_row||^2 depends only on (i, k): zero it once per row-block and
        # let the scratch persist across the j sweep (j axis is sequential).
        @pl.when((j == 0) & (k == 0))
        def _():
            xss_ref[...] = jnp.zeros_like(xss_ref)
    else:
        @pl.when(k == 0)
        def _():
            xss_ref[...] = jnp.zeros_like(xss_ref)

    x = x_ref[...]          # (tm, tk), operand dtype -> MXU
    w = w_ref[...]          # (tn, tk), operand dtype -> MXU

    # x @ W.T without materializing a transpose: contract the last axis of
    # both tiles (native transposed-RHS MXU matmul), accumulate in f32.
    acc_ref[...] += lax.dot_general(
        x, w,
        dimension_numbers=(((1,), (1,)), ((), ())),
        preferred_element_type=jnp.float32)

    def _accum_xss():
        xf = x.astype(jnp.float32)
        xss_ref[...] += jnp.sum(xf * xf, axis=1, keepdims=True)   # (tm, 1)

    if xss_persists:
        @pl.when(j == 0)
        def _():
            _accum_xss()
    else:
        _accum_xss()

    @pl.when(k == pl.num_programs(2) - 1)
    def _():
        # F.normalize(p=2, eps=1e-12): v / max(||v||, eps)
        #   == v * rsqrt(max(sum_sq, eps^2)); (1e-12)^2 = 1e-24 is normal f32.
        x_scale = lax.rsqrt(jnp.maximum(xss_ref[...], jnp.float32(1e-24)))
        # wscale_ref already holds sigma * rsqrt(max(||W_row||^2, eps^2)).
        o_ref[...] = (acc_ref[...] * x_scale * wscale_ref[...]).astype(o_ref.dtype)


def cosine_linear(x, weight, sigma=None, *, tm_max=512, tn_max=512, tk_max=1024):
    """x: (B, in_features); weight: (out_features, in_features); sigma: scalar or None."""
    B, K = x.shape
    O, K2 = weight.shape
    assert K == K2, "in_features mismatch"

    itemsize = jnp.dtype(x.dtype).itemsize
    sub = {4: 8, 2: 16, 1: 32}.get(itemsize, 8)   # sublane multiple per dtype

    tm = min(tm_max, _round_up(B, sub))
    tn = min(tn_max, _round_up(O, 128))           # lane-dense output tiles
    tk = min(tk_max, _round_up(K, 128))

    Mp = _round_up(B, tm)
    Op = _round_up(O, tn)
    Kp = _round_up(K, tk)
    m_blocks, n_blocks, k_blocks = Mp // tm, Op // tn, Kp // tk

    sigma_f = (jnp.float32(1.0) if sigma is None
               else jnp.asarray(sigma, jnp.float32).reshape(()))

    # Precompute sigma * 1/||W_row|| once (W is a static parameter).
    wss = jnp.sum(jnp.square(weight.astype(jnp.float32)), axis=1)          # (O,)
    w_scale = (sigma_f * lax.rsqrt(jnp.maximum(wss, jnp.float32(1e-24)))
               ).reshape(1, O)

    xp = x if (Mp, Kp) == (B, K) else jnp.pad(x, ((0, Mp - B), (0, Kp - K)))
    wp = weight if (Op, Kp) == (O, K) else jnp.pad(weight, ((0, Op - O), (0, Kp - K)))
    wsp = w_scale if Op == O else jnp.pad(w_scale, ((0, 0), (0, Op - O)))

    out_dtype = x.dtype
    out_is_f32 = jnp.dtype(out_dtype) == jnp.float32

    # Persist the x row-norm scratch across j only when the i axis can carry
    # the megacore split; otherwise recompute per j and let j be parallel.
    xss_persists = (m_blocks > 1) or (n_blocks == 1)
    if xss_persists:
        dims = ("parallel", "arbitrary", "arbitrary")
    else:
        dims = ("parallel", "parallel", "arbitrary")

    scratch_shapes = []
    if not out_is_f32:
        scratch_shapes.append(pltpu.VMEM((tm, tn), jnp.float32))  # f32 accumulator
    scratch_shapes.append(pltpu.VMEM((tm, 1), jnp.float32))       # per-row ||x||^2

    # VMEM working-set estimate (double-buffered inputs/outputs + scratch);
    # raise the scoped limit accordingly (v5e default is only 16 MiB).
    out_itemsize = jnp.dtype(out_dtype).itemsize
    vmem_est = (2 * (tm + tn) * tk * itemsize
                + 2 * tm * tn * out_itemsize
                + 2 * tn * 4
                + (0 if out_is_f32 else tm * tn * 4)
                + tm * 4)
    vmem_limit = int(min(max(int(1.5 * vmem_est), 32 << 20), 100 << 20))

    kernel = functools.partial(_cosine_linear_kernel, xss_persists=xss_persists)

    out = pl.pallas_call(
        kernel,
        out_shape=jax.ShapeDtypeStruct((Mp, Op), out_dtype),
        grid_spec=pltpu.PrefetchScalarGridSpec(
            num_scalar_prefetch=0,
            grid=(m_blocks, n_blocks, k_blocks),
            in_specs=[
                pl.BlockSpec((tm, tk), lambda i, j, k: (i, k)),   # x tile
                pl.BlockSpec((tn, tk), lambda i, j, k: (j, k)),   # W tile
                pl.BlockSpec((1, tn), lambda i, j, k: (0, j)),    # sigma/||W|| scale
            ],
            out_specs=pl.BlockSpec((tm, tn), lambda i, j, k: (i, j)),
            scratch_shapes=scratch_shapes,
        ),
        compiler_params=pltpu.CompilerParams(
            dimension_semantics=dims,
            vmem_limit_bytes=vmem_limit),
    )(xp, wp, wsp)

    return out[:B, :O]


def reference(x, weight, sigma):
    eps = 1e-12
    xn = x / jnp.maximum(jnp.linalg.norm(x, axis=1, keepdims=True), eps)
    wn = weight / jnp.maximum(jnp.linalg.norm(weight, axis=1, keepdims=True), eps)
    s = 1.0 if sigma is None else sigma
    return s * (xn @ wn.T)


if __name__ == "__main__":
    # Small shapes consistent with the module: batch=8, in_features=32, out=16.
    B, in_features, out_features = 8, 32, 16

    key = jax.random.PRNGKey(0)
    kx, kw = jax.random.split(key)

    x = jax.random.normal(kx, (B, in_features), dtype=jnp.float32)

    # Deterministic parameter init matching reset_parameters():
    # weight ~ U(-stdv, stdv) with stdv = 1/sqrt(in_features); sigma = 1.0.
    stdv = 1.0 / math.sqrt(in_features)
    weight = jax.random.uniform(
        kw, (out_features, in_features), dtype=jnp.float32,
        minval=-stdv, maxval=stdv)
    sigma = jnp.float32(1.0)

    out = cosine_linear(x, weight, sigma)
    jax.block_until_ready(out)
    ref = reference(x, weight, sigma)
    assert out.shape == (B, out_features)
    assert jnp.allclose(out, ref, atol=1e-5, rtol=1e-5), "mismatch vs reference"

    # Check 2: non-aligned shapes exercising padding (single-tile grid).
    B2, K2, O2 = 48, 200, 300
    k1, k2 = jax.random.split(jax.random.PRNGKey(1))
    x2 = jax.random.normal(k1, (B2, K2), dtype=jnp.float32)
    w2 = jax.random.uniform(k2, (O2, K2), dtype=jnp.float32,
                            minval=-1.0 / math.sqrt(K2), maxval=1.0 / math.sqrt(K2))
    out2 = cosine_linear(x2, w2, jnp.float32(2.0))
    jax.block_until_ready(out2)
    ref2 = reference(x2, w2, jnp.float32(2.0))
    assert out2.shape == (B2, O2)
    assert jnp.allclose(out2, ref2, atol=2e-5, rtol=2e-5), "mismatch (padded case)"

    # Check 3: multi-block grid on all three axes, exercising the persistent
    # x-norm scratch (m_blocks > 1) with small forced tiles.
    B3, K3, O3 = 272, 384, 512
    k3, k4 = jax.random.split(jax.random.PRNGKey(2))
    x3 = jax.random.normal(k3, (B3, K3), dtype=jnp.float32)
    w3 = jax.random.uniform(k4, (O3, K3), dtype=jnp.float32,
                            minval=-1.0 / math.sqrt(K3), maxval=1.0 / math.sqrt(K3))
    out3 = cosine_linear(x3, w3, jnp.float32(1.5),
                         tm_max=128, tn_max=256, tk_max=128)
    jax.block_until_ready(out3)
    ref3 = reference(x3, w3, jnp.float32(1.5))
    assert jnp.allclose(out3, ref3, atol=2e-5, rtol=2e-5), "mismatch (multi-tile)"

    # Check 4: small batch + many output blocks -> non-persistent xss path
    # (both leading grid axes parallel).
    B4, K4, O4 = 16, 256, 640
    k5, k6 = jax.random.split(jax.random.PRNGKey(3))
    x4 = jax.random.normal(k5, (B4, K4), dtype=jnp.float32)
    w4 = jax.random.uniform(k6, (O4, K4), dtype=jnp.float32,
                            minval=-1.0 / math.sqrt(K4), maxval=1.0 / math.sqrt(K4))
    out4 = cosine_linear(x4, w4, None, tm_max=128, tn_max=256, tk_max=128)
    jax.block_until_ready(out4)
    ref4 = reference(x4, w4, None)
    assert jnp.allclose(out4, ref4, atol=2e-5, rtol=2e-5), "mismatch (small-batch)"

    print("KERNEL_OK")
</pallas_src>

<mosaic_0001>
module attributes {stable_mosaic.version = 11 : i64} {
  func.func @_cosine_linear_kernel(%arg0: i32, %arg1: i32, %arg2: i32, %arg3: memref<8x128xf32, #tpu.memory_space<vmem>>, %arg4: memref<128x128xf32, #tpu.memory_space<vmem>>, %arg5: memref<1x128xf32, #tpu.memory_space<vmem>>, %arg6: memref<8x128xf32, #tpu.memory_space<vmem>>, %arg7: memref<8x1xf32, #tpu.memory_space<vmem>>) attributes {dimension_semantics = [#tpu.dimension_semantics<parallel>, #tpu.dimension_semantics<arbitrary>, #tpu.dimension_semantics<arbitrary>], iteration_bounds = array<i64: 1, 1, 1>, scalar_prefetch = 0 : i64, scratch_operands = 1 : i64, tpu.core_type = #tpu.core_type<tc>, window_params = [{transform_indices = @transform_0, window_bounds = array<i64: 8, 128>}, {transform_indices = @transform_1, window_bounds = array<i64: 128, 128>}, {transform_indices = @transform_2, window_bounds = array<i64: 1, 128>}, {transform_indices = @transform_3, window_bounds = array<i64: 8, 128>}]} {
    %c0_i32 = arith.constant 0 : i32
    %0 = arith.cmpi eq, %arg2, %c0_i32 : i32
    %1 = arith.extui %0 : i1 to i32
    %c0_i32_0 = arith.constant 0 : i32
    %2 = arith.cmpi ne, %1, %c0_i32_0 : i32
    scf.if %2 {
      %cst_15 = arith.constant 0.000000e+00 : f32
      %20 = vector.broadcast %cst_15 : f32 to vector<8x128xf32>
      %c0_16 = arith.constant 0 : index
      %c0_17 = arith.constant 0 : index
      %21 = vector.load %arg6[%c0_16, %c0_17] : memref<8x128xf32, #tpu.memory_space<vmem>>, vector<8x128xf32>
      tpu.vector_store %arg6[%c0_16, %c0_17], %20 {strides = array<i32>} : memref<8x128xf32, #tpu.memory_space<vmem>>, vector<8x128xf32>,
    } else {
    }
    %c0_i32_1 = arith.constant 0 : i32
    %3 = arith.cmpi eq, %arg1, %c0_i32_1 : i32
    %c0_i32_2 = arith.constant 0 : i32
    %4 = arith.cmpi eq, %arg2, %c0_i32_2 : i32
    %5 = arith.andi %3, %4 : i1
    %6 = arith.extui %5 : i1 to i32
    %c0_i32_3 = arith.constant 0 : i32
    %7 = arith.cmpi ne, %6, %c0_i32_3 : i32
    scf.if %7 {
      %cst_15 = arith.constant 0.000000e+00 : f32
      %20 = vector.broadcast %cst_15 : f32 to vector<8x1xf32>
      %c0_16 = arith.constant 0 : index
      %c0_17 = arith.constant 0 : index
      %21 = vector.load %arg7[%c0_16, %c0_17] : memref<8x1xf32, #tpu.memory_space<vmem>>, vector<8x1xf32>
      tpu.vector_store %arg7[%c0_16, %c0_17], %20 {strides = array<i32>} : memref<8x1xf32, #tpu.memory_space<vmem>>, vector<8x1xf32>,
    } else {
    }
    %c0 = arith.constant 0 : index
    %c0_4 = arith.constant 0 : index
    %8 = vector.load %arg3[%c0, %c0_4] : memref<8x128xf32, #tpu.memory_space<vmem>>, vector<8x128xf32>
    %c0_5 = arith.constant 0 : index
    %c0_6 = arith.constant 0 : index
    %9 = vector.load %arg4[%c0_5, %c0_6] : memref<128x128xf32, #tpu.memory_space<vmem>>, vector<128x128xf32>
    %c0_7 = arith.constant 0 : index
    %c0_8 = arith.constant 0 : index
    %10 = vector.load %arg6[%c0_7, %c0_8] : memref<8x128xf32, #tpu.memory_space<vmem>>, vector<8x128xf32>
    %cst = arith.constant dense<0.000000e+00> : vector<8x128xf32>
    %11 = tpu.matmul %8, %9, %cst {dimension_numbers = #tpu.dot_dimension_numbers<[1], [1], [0], [0], [0, 0, 1, 0], [], []>} : vector<8x128xf32>, vector<128x128xf32>, vector<8x128xf32> -> vector<8x128xf32>
    %12 = arith.addf %10, %11 : vector<8x128xf32>
    %c0_9 = arith.constant 0 : index
    %c0_10 = arith.constant 0 : index
    %13 = vector.load %arg6[%c0_9, %c0_10] : memref<8x128xf32, #tpu.memory_space<vmem>>, vector<8x128xf32>
    tpu.vector_store %arg6[%c0_9, %c0_10], %12 {strides = array<i32>} : memref<8x128xf32, #tpu.memory_space<vmem>>, vector<8x128xf32>,
    %c0_i32_11 = arith.constant 0 : i32
    %14 = arith.cmpi eq, %arg1, %c0_i32_11 : i32
    %15 = arith.extui %14 : i1 to i32
    %c0_i32_12 = arith.constant 0 : i32
    %16 = arith.cmpi ne, %15, %c0_i32_12 : i32
    scf.if %16 {
      %c0_15 = arith.constant 0 : index
      %c0_16 = arith.constant 0 : index
      %20 = vector.load %arg7[%c0_15, %c0_16] : memref<8x1xf32, #tpu.memory_space<vmem>>, vector<8x1xf32>
      %21 = arith.mulf %8, %8 : vector<8x128xf32>
      %cst_17 = arith.constant dense<0.000000e+00> : vector<8xf32>
      %22 = vector.multi_reduction <add>, %21, %cst_17 [1] : vector<8x128xf32> to vector<8xf32>
      %23 = vector.shape_cast %22 : vector<8xf32> to vector<8x1xf32>
      %24 = arith.addf %20, %23 : vector<8x1xf32>
      %c0_18 = arith.constant 0 : index
      %c0_19 = arith.constant 0 : index
      %25 = vector.load %arg7[%c0_18, %c0_19] : memref<8x1xf32, #tpu.memory_space<vmem>>, vector<8x1xf32>
      tpu.vector_store %arg7[%c0_18, %c0_19], %24 {strides = array<i32>} : memref<8x1xf32, #tpu.memory_space<vmem>>, vector<8x1xf32>,
    } else {
    }
    %c0_i32_13 = arith.constant 0 : i32
    %17 = arith.cmpi eq, %arg2, %c0_i32_13 : i32
    %18 = arith.extui %17 : i1 to i32
    %c0_i32_14 = arith.constant 0 : i32
    %19 = arith.cmpi ne, %18, %c0_i32_14 : i32
    scf.if %19 {
      %c0_15 = arith.constant 0 : index
      %c0_16 = arith.constant 0 : index
      %20 = vector.load %arg7[%c0_15, %c0_16] : memref<8x1xf32, #tpu.memory_space<vmem>>, vector<8x1xf32>
      %cst_17 = arith.constant 1.000000e-24 : f32
      %21 = vector.broadcast %cst_17 : f32 to vector<8x1xf32>
      %22 = arith.maximumf %20, %21 : vector<8x1xf32>
      %23 = math.rsqrt %22 : vector<8x1xf32>
      %c0_18 = arith.constant 0 : index
      %c0_19 = arith.constant 0 : index
      %24 = vector.load %arg6[%c0_18, %c0_19] : memref<8x128xf32, #tpu.memory_space<vmem>>, vector<8x128xf32>
      %25 = vector.broadcast %23 : vector<8x1xf32> to vector<8x128xf32>
      %26 = arith.mulf %24, %25 : vector<8x128xf32>
      %c0_20 = arith.constant 0 : index
      %c0_21 = arith.constant 0 : index
      %27 = vector.load %arg5[%c0_20, %c0_21] : memref<1x128xf32, #tpu.memory_space<vmem>>, vector<1x128xf32>
      %28 = vector.broadcast %27 : vector<1x128xf32> to vector<8x128xf32>
      %29 = arith.mulf %26, %28 : vector<8x128xf32>
      %c0_22 = arith.constant 0 : index
      %c0_23 = arith.constant 0 : index
      %30 = vector.load %arg6[%c0_22, %c0_23] : memref<8x128xf32, #tpu.memory_space<vmem>>, vector<8x128xf32>
      tpu.vector_store %arg6[%c0_22, %c0_23], %29 {strides = array<i32>} : memref<8x128xf32, #tpu.memory_space<vmem>>, vector<8x128xf32>,
    } else {
    }
    return
  }
  func.func @transform_0(%arg0: i32, %arg1: i32, %arg2: i32) -> (i32, i32) {
    %c0_i32 = arith.constant 0 : i32
    return %arg0, %arg2 : i32, i32
  }
  func.func @transform_1(%arg0: i32, %arg1: i32, %arg2: i32) -> (i32, i32) {
    %c0_i32 = arith.constant 0 : i32
    return %arg1, %arg2 : i32, i32
  }
  func.func @transform_2(%arg0: i32, %arg1: i32, %arg2: i32) -> (i32, i32) {
    %c0_i32 = arith.constant 0 : i32
    %c0_i32_0 = arith.constant 0 : i32
    return %c0_i32, %arg1 : i32, i32
  }
  func.func @transform_3(%arg0: i32, %arg1: i32, %arg2: i32) -> (i32, i32) {
    %c0_i32 = arith.constant 0 : i32
    return %arg0, %arg1 : i32, i32
  }
}

</mosaic_0001>

<llo_original>
// kernel: tpu_custom_call.1
$region0: #{tpu_custom_call.1}
  #allocation0 [shape = 'u32[]', space=smem, size = 0x4, offset = 0x4, fixed_abs, tag = 'smem constant byte address 0x4 - core index']
  #allocation1 [shape = 'u32[144,128]{1,0:T(1,128)}', space=vmem, size = 0x12000, scoped, tag = 'internal scratch']
  #allocation2 [shape = 'f32[8,1]{1,0:T(8,128)}', space=vmem, size = 0x1000, scoped, tag = 'scratch operand']
  %s0 = inlined_call_operand.hbm [shape: f32[8,128], index: 0, kind: input, shape index: {}]
  %s1 = inlined_call_operand.hbm [shape: f32[128,128], index: 1, kind: input, shape index: {}]
  %s2 = inlined_call_operand.vmem [shape: f32[1,128], index: 2, kind: input, shape index: {}]
  %s3 = inlined_call_operand.hbm [shape: f32[8,128], index: 3, kind: output, shape index: {}]
  %s4 = sld [smem:[#allocation0]]
  $region46: #{tpu_custom_call.1} parent=0
    _
  %s6 = ssub.s32 1, %s4
  %s7 = scalar_select 0, %s6, %s4
  $region1: #{tpu_custom_call.1} parent=0
    #allocation3 [shape = 'u8[4096]{0}', space=vmem, size = 0x1000, scoped, tag = 'input window, operand 0, single buffered']
    #allocation4 [shape = 's32[1]{0}', space=sflag, size = 0x4, scoped, tag = 'scoped memory for tpu_custom_call.1']
    #allocation5 [shape = 's32[1]{0}', space=sflag, size = 0x4, scoped, tag = 'scoped memory for tpu_custom_call.1']
    #allocation6 [shape = 'u8[65536]{0}', space=vmem, size = 0x10000, scoped, tag = 'input window, operand 1, single buffered']
    #allocation7 [shape = 's32[1]{0}', space=sflag, size = 0x4, scoped, tag = 'scoped memory for tpu_custom_call.1']
    #allocation8 [shape = 'u8[4096]{0}', space=vmem, size = 0x1000, scoped, tag = 'output window, operand 0, single buffered']
    %8 = vsyncpa [#allocation4], 0
    %9 = vsyncpa [#allocation7], 0
    %10 = vsyncpa [#allocation5], 0
    // Predicated region
    $region2: #{tpu_custom_call.1} parent=1 // pred_check
      _
    $region3: #{tpu_custom_call.1} parent=1 // pred_check_branch
      %12 = sbr.rel (0) target = $region5
    $region4: #{tpu_custom_call.1} parent=1 // pred_region
      %s14 = ssub.s32 128, 128
      %15 = vsyncadd [#allocation4], %s14
      %s17 = sshll.u32 [#allocation3], 4
      %s18 = int_to_ptr.vmem [resolvable:$true] %s17
      %20 = dma.hbm_to_vmem [thread:$0]  %s0, 128, %s18, [#allocation4]
    $region5: #{tpu_custom_call.1} parent=1 // pred_fallthru
      _
    // Predicated region
    $region6: #{tpu_custom_call.1} parent=1 // pred_check
      _
    $region7: #{tpu_custom_call.1} parent=1 // pred_check_branch
      %22 = sbr.rel (0) target = $region9
    $region8: #{tpu_custom_call.1} parent=1 // pred_region
      %s24 = ssub.s32 2048, 2048
      %25 = vsyncadd [#allocation7], %s24
      %s26 = sshll.u32 [#allocation6], 4
      %s27 = int_to_ptr.vmem [resolvable:$true] %s26
      %32 = dma.hbm_to_vmem [thread:$0]  %s1, 2048, %s27, [#allocation7], 128, 128, 8
    $region9: #{tpu_custom_call.1} parent=1 // pred_fallthru
      _
    // Predicated region
    $region10: #{tpu_custom_call.1} parent=1 // pred_check
      _
    $region11: #{tpu_custom_call.1} parent=1 // pred_check_branch
      %34 = sbr.rel (0) target = $region13
    $region12: #{tpu_custom_call.1} parent=1 // pred_region
      _
    $region13: #{tpu_custom_call.1} parent=1 // pred_fallthru
      _
    // Predicated region
    $region14: #{tpu_custom_call.1} parent=1 // pred_check
      _
    $region15: #{tpu_custom_call.1} parent=1 // pred_check_branch
      %36 = sbr.rel (0) target = $region17
    $region16: #{tpu_custom_call.1} parent=1 // pred_region
      %37 = dma.done [#allocation4], 128
    $region17: #{tpu_custom_call.1} parent=1 // pred_fallthru
      _
    // Predicated region
    $region18: #{tpu_custom_call.1} parent=1 // pred_check
      _
    $region19: #{tpu_custom_call.1} parent=1 // pred_check_branch
      %39 = sbr.rel (0) target = $region21
    $region20: #{tpu_custom_call.1} parent=1 // pred_region
      %40 = dma.done [#allocation7], 2048
    $region21: #{tpu_custom_call.1} parent=1 // pred_fallthru
      _
    %p41 = scmp.eq.s32.totalorder 0, 0
    // Predicated region
    $region22: #{tpu_custom_call.1} parent=1 // pred_check
      %p42 = pneg %p41
    $region23: #{tpu_custom_call.1} parent=1 // pred_check_branch
      %44 = sbr.rel (%p42) target = $region25
    $region24: #{tpu_custom_call.1} parent=1 // pred_region
      %45 = vst [vmem:[#allocation8] sm:$0xff] 0.0
    $region25: #{tpu_custom_call.1} parent=1 // pred_fallthru
      _
    %p46 = scmp.eq.s32.totalorder 0, 0
    %p47 = pnand %p46, %p41
    %p48 = pneg %p47
    // Predicated region
    $region26: #{tpu_custom_call.1} parent=1 // pred_check
      _
    $region27: #{tpu_custom_call.1} parent=1 // pred_check_branch
      %50 = sbr.rel (%p47) target = $region29
    $region28: #{tpu_custom_call.1} parent=1 // pred_region
      %vm51 = vcmask 7168
      %52 = vst.msk [vmem:[#allocation2] sm:$0xff] %vm51, 0.0
    $region29: #{tpu_custom_call.1} parent=1 // pred_fallthru
      _
    %v53 = vld [vmem:[#allocation3] sm:$0xff]
    %v54 = vld [vmem:[#allocation6] sm:$0xff]
    %v55 = vld [vmem:[#allocation6 + $0x8] sm:$0xff]
    %v56 = vld [vmem:[#allocation6 + $0x10] sm:$0xff]
    %v57 = vld [vmem:[#allocation6 + $0x18] sm:$0xff]
    %v58 = vld [vmem:[#allocation6 + $0x20] sm:$0xff]
    %v59 = vld [vmem:[#allocation6 + $0x28] sm:$0xff]
    %v60 = vld [vmem:[#allocation6 + $0x30] sm:$0xff]
    %v61 = vld [vmem:[#allocation6 + $0x38] sm:$0xff]
    %v62 = vld [vmem:[#allocation6 + $0x40] sm:$0xff]
    %v63 = vld [vmem:[#allocation6 + $0x48] sm:$0xff]
    %v64 = vld [vmem:[#allocation6 + $0x50] sm:$0xff]
    %v65 = vld [vmem:[#allocation6 + $0x58] sm:$0xff]
    %v66 = vld [vmem:[#allocation6 + $0x60] sm:$0xff]
    %v67 = vld [vmem:[#allocation6 + $0x68] sm:$0xff]
    %v68 = vld [vmem:[#allocation6 + $0x70] sm:$0xff]
    %v69 = vld [vmem:[#allocation6 + $0x78] sm:$0xff]
    %v70 = vld [vmem:[#allocation8] sm:$0xff]
    %71 = vmatprep.subr.mxu0 0.0
    %72 = vmatpush1.xpose.msra.mxu0 %v54
    %73 = vmatprep.subr.mxu0 0.0
    %74 = vmatpush1.xpose.msra.mxu0 %v55
    %75 = vmatprep.subr.mxu0 0.0
    %76 = vmatpush1.xpose.msra.mxu0 %v56
    %77 = vmatprep.subr.mxu0 0.0
    %78 = vmatpush1.xpose.msra.mxu0 %v57
    %79 = vmatprep.subr.mxu0 0.0
    %80 = vmatpush1.xpose.msra.mxu0 %v58
    %81 = vmatprep.subr.mxu0 0.0
    %82 = vmatpush1.xpose.msra.mxu0 %v59
    %83 = vmatprep.subr.mxu0 0.0
    %84 = vmatpush1.xpose.msra.mxu0 %v60
    %85 = vmatprep.subr.mxu0 0.0
    %86 = vmatpush1.xpose.msra.mxu0 %v61
    %87 = vmatprep.subr.mxu0 0.0
    %88 = vmatpush1.xpose.msra.mxu0 %v62
    %89 = vmatprep.subr.mxu0 0.0
    %90 = vmatpush1.xpose.msra.mxu0 %v63
    %91 = vmatprep.subr.mxu0 0.0
    %92 = vmatpush1.xpose.msra.mxu0 %v64
    %93 = vmatprep.subr.mxu0 0.0
    %94 = vmatpush1.xpose.msra.mxu0 %v65
    %95 = vmatprep.subr.mxu0 0.0
    %96 = vmatpush1.xpose.msra.mxu0 %v66
    %97 = vmatprep.subr.mxu0 0.0
    %98 = vmatpush1.xpose.msra.mxu0 %v67
    %99 = vmatprep.subr.mxu0 0.0
    %100 = vmatpush1.xpose.msra.mxu0 %v68
    %101 = vmatprep.subr.mxu0 0.0
    %102 = vmatpush1.xpose.msra.mxu0 %v69
    %103 = vmatprep.subr.mxu0 0.0
    %104 = vmatpush1.xpose.msra.mxu0 0.0
    %105 = vmatprep.subr.mxu0 0.0
    %106 = vmatpush1.xpose.msra.mxu0 0.0
    %107 = vmatprep.subr.mxu0 0.0
    %108 = vmatpush1.xpose.msra.mxu0 0.0
    %109 = vmatprep.subr.mxu0 0.0
    %110 = vmatpush1.xpose.msra.mxu0 0.0
    %111 = vmatprep.subr.mxu0 0.0
    %112 = vmatpush1.xpose.msra.mxu0 0.0
    %113 = vmatprep.subr.mxu0 0.0
    %114 = vmatpush1.xpose.msra.mxu0 0.0
    %115 = vmatprep.subr.mxu0 0.0
    %116 = vmatpush1.xpose.msra.mxu0 0.0
    %117 = vmatprep.subr.mxu0 0.0
    %118 = vmatpush1.xpose.msra.mxu0 0.0
    %119 = vmatprep.subr.mxu0 0.0
    %120 = vmatpush1.xpose.msra.mxu0 0.0
    %121 = vmatprep.subr.mxu0 0.0
    %122 = vmatpush1.xpose.msra.mxu0 0.0
    %123 = vmatprep.subr.mxu0 0.0
    %124 = vmatpush1.xpose.msra.mxu0 0.0
    %125 = vmatprep.subr.mxu0 0.0
    %126 = vmatpush1.xpose.msra.mxu0 0.0
    %127 = vmatprep.subr.mxu0 0.0
    %128 = vmatpush1.xpose.msra.mxu0 0.0
    %129 = vmatprep.subr.mxu0 0.0
    %130 = vmatpush1.xpose.msra.mxu0 0.0
    %131 = vmatprep.subr.mxu0 0.0
    %132 = vmatpush1.xpose.msra.mxu0 0.0
    %133 = vmatprep.subr.mxu0 0.0
    %134 = vmatpush1.xpose.msra.mxu0 0.0
    %135 = vmatprep.mubr.f32.mxu0 0.0
    %136 = vmatmul.mubr.f32.gmra.mrb[0].mxu0 %v53
    %v137 = vpop.f32.mrb[0].mxu0
    %v138 = vadd.f32 0.0, %v137
    %v139 = vpop.f32.mrb[0].mxu0
    %140 = vdwg.mxu0
    %v141 = vadd.f32 %v70, %v138
    %142 = vst [vmem:[#allocation8] sm:$0xff] %v141
    // Predicated region
    $region30: #{tpu_custom_call.1} parent=1 // pred_check
      %p143 = pneg %p46
    $region31: #{tpu_custom_call.1} parent=1 // pred_check_branch
      %145 = sbr.rel (%p143) target = $region33
    $region32: #{tpu_custom_call.1} parent=1 // pred_region
      %v146 = vld [vmem:[#allocation2] sm:$0xff]
      %v147 = vmul.f32 %v53, %v53
      %148 = vadd.xlane.f32.xlu0 %v147
      %v149 = vpop.xlane.xlu0 %148
      %v150 = vadd.f32 %v146, %v149
      %vm151 = vcmask 7168
      %152 = vst.msk [vmem:[#allocation2] sm:$0xff] %vm151, %v150
    $region33: #{tpu_custom_call.1} parent=1 // pred_fallthru
      _
    // Predicated region
    $region34: #{tpu_custom_call.1} parent=1 // pred_check
      %p153 = pneg %p41
    $region35: #{tpu_custom_call.1} parent=1 // pred_check_branch
      %155 = sbr.rel (%p153) target = $region37
    $region36: #{tpu_custom_call.1} parent=1 // pred_region
      %v156 = vld [vmem:[#allocation2] sm:$0xff]
      %v157 = vmax.f32 %v156, 1e-24
      %v158 = vrsqrt.pop %v157
      %v159 = vld [vmem:[#allocation8] sm:$0xff]
      %161 = vset.pattern.permute.xlu0 0
      %162 = vperm.xlu0 %161, %v158
      %v163 = vpop.permute.xlu0 %162
      %v165 = vmul.f32 %v159, %v163
      %v166 = vld [vmem:[%s2] sm:$0x1]
      %v168 = vlaneseq
      %v169 = vshrl.u32 %v168, 7
      %v170 = vsub.s32 0, %v169
      %v171 = vrot.slane %v166, %v170
      %v173 = vmul.f32 %v165, %v171
      %174 = vst [vmem:[#allocation8] sm:$0xff] %v173
    $region37: #{tpu_custom_call.1} parent=1 // pred_fallthru
      _
    // Predicated region
    $region38: #{tpu_custom_call.1} parent=1 // pred_check
      _
    $region39: #{tpu_custom_call.1} parent=1 // pred_check_branch
      %176 = sbr.rel (0) target = $region41
    $region40: #{tpu_custom_call.1} parent=1 // pred_region
      %s178 = ssub.s32 128, 128
      %179 = vsyncadd [#allocation5], %s178
      %s181 = sshll.u32 [#allocation8], 4
      %s182 = int_to_ptr.vmem [resolvable:$true] %s181
      %184 = dma.vmem_to_hbm [thread:$0]  %s182, 128, %s3, [#allocation5]
    $region41: #{tpu_custom_call.1} parent=1 // pred_fallthru
      _
    // Predicated region
    $region42: #{tpu_custom_call.1} parent=1 // pred_check
      _
    $region43: #{tpu_custom_call.1} parent=1 // pred_check_branch
      %186 = sbr.rel (0) target = $region45
    $region44: #{tpu_custom_call.1} parent=1 // pred_region
      %187 = dma.done [#allocation5], 128
    $region45: #{tpu_custom_call.1} parent=1 // pred_fallthru
      _
    %188 = vsyncpa [#allocation4], 1
    %189 = vsyncpa [#allocation7], 1
    %190 = vsyncpa [#allocation5], 1

</llo_original>
